<compile_context>
chip_gen: v5e
topology: v5e:2x2
jax: 0.10.0
libtpu: 0.0.40
codegen_flags: <defaults>
</compile_context>

<pallas_src>
import jax
import jax.numpy as jnp
from jax.experimental import pallas as pl
from jax.experimental.pallas import tpu as pltpu

LN_EPS = 1e-5


def _round_up(x, m):
    return ((x + m - 1) // m) * m


def base_sublayer_kernel(x_ref, g_ref, b_ref, w1_ref, b1_ref, w2_ref, b2_ref,
                         o_ref):
    """One tile of rows: LayerNorm -> ff1 -> relu -> ff2 -> +residual."""
    # --- LayerNorm in f32 (biased variance, eps=1e-5, torch defaults). ------
    xf = x_ref[...].astype(jnp.float32)                      # (tm, D)
    mean = jnp.mean(xf, axis=-1, keepdims=True)
    xc = xf - mean
    var = jnp.mean(xc * xc, axis=-1, keepdims=True)
    xn = xc * jax.lax.rsqrt(var + LN_EPS)
    xn = xn * g_ref[...] + b_ref[...]                         # (tm, D) f32

    # --- ff1: bf16 operands on the MXU, f32 accumulate; bias + relu in f32. -
    h = jnp.dot(xn.astype(jnp.bfloat16), w1_ref[...],
                preferred_element_type=jnp.float32)           # (tm, F)
    h = jnp.maximum(h + b1_ref[...], 0.0)

    # --- ff2: bf16 operands (cast AFTER relu), f32 accumulate; bias in f32. -
    y = jnp.dot(h.astype(jnp.bfloat16), w2_ref[...],
                preferred_element_type=jnp.float32)           # (tm, D)
    y = y + b2_ref[...]

    # --- Residual: re-read the resident input tile (short live range). ------
    o_ref[...] = (x_ref[...].astype(jnp.float32) + y).astype(o_ref.dtype)


def _vmem_budget_bytes(tm, D, F, act_itemsize):
    """Rough VMEM budget: bf16 weights single-buffered + double-buffered
    activation tiles + f32 working set, with 50% headroom, clamped to a range
    that is valid on v5e/v6e (128 MiB) and v7x (64 MiB physical)."""
    weights = 2 * D * F * 2                      # w1 + w2, bf16, 1 buffer each
    act_in = 2 * tm * D * act_itemsize           # input tile, double-buffered
    act_out = 2 * tm * D * act_itemsize          # output tile, double-buffered
    interm = tm * F * 4 + 2 * tm * D * 4         # h, xn/y f32 working set
    small = 2 * (3 * D + F) * 4                  # gamma/beta/biases
    est = weights + act_in + act_out + interm + small
    return int(min(64 * 1024 * 1024, max(32 * 1024 * 1024, est * 3 // 2)))


def _build_call(rows_p, D, F, tm, out_dtype, vmem_limit_bytes,
                single_buffer_weights):
    if single_buffer_weights:
        # Grid-invariant operands: ask for a single VMEM buffer.
        const_spec = lambda shape: pl.BlockSpec(
            shape, lambda i: (0, 0), pipeline_mode=pl.Buffered(1))
    else:
        const_spec = lambda shape: pl.BlockSpec(shape, lambda i: (0, 0))

    row_spec = pl.BlockSpec((tm, D), lambda i: (i, 0))

    return pl.pallas_call(
        base_sublayer_kernel,
        out_shape=jax.ShapeDtypeStruct((rows_p, D), out_dtype),
        grid_spec=pltpu.PrefetchScalarGridSpec(
            num_scalar_prefetch=0,
            grid=(rows_p // tm,),
            in_specs=[
                row_spec,             # xs tile          (tm, D), native dtype
                const_spec((1, D)),   # layernorm gamma  f32
                const_spec((1, D)),   # layernorm beta   f32
                const_spec((D, F)),   # ff1 weight       bf16 (pre-transposed)
                const_spec((1, F)),   # ff1 bias         f32
                const_spec((F, D)),   # ff2 weight       bf16 (pre-transposed)
                const_spec((1, D)),   # ff2 bias         f32
            ],
            out_specs=row_spec,
        ),
        compiler_params=pltpu.CompilerParams(
            dimension_semantics=("parallel",),
            vmem_limit_bytes=vmem_limit_bytes),
    )


def base_sublayer(xs, ln_g, ln_b, w1, b1, w2, b2, *, tm=256):
    """xs: (rows, D). w1: (D, F), w2: (F, D). Returns (rows, D)."""
    rows, D = xs.shape
    F = w1.shape[1]

    # Clamp the tile to the (8-aligned) row count so tiny inputs are not
    # padded all the way to 256 rows, then pad rows to a multiple of tm
    # (cdiv-style grid instead of a divisibility assert).
    tm = min(tm, _round_up(rows, 8))
    rows_p = _round_up(rows, tm)
    xs_p = xs if rows_p == rows else jnp.pad(xs, ((0, rows_p - rows), (0, 0)))

    args = (
        xs_p,
        ln_g.reshape(1, D).astype(jnp.float32),
        ln_b.reshape(1, D).astype(jnp.float32),
        w1.astype(jnp.bfloat16),
        b1.reshape(1, F).astype(jnp.float32),
        w2.astype(jnp.bfloat16),
        b2.reshape(1, D).astype(jnp.float32),
    )
    vmem_limit = _vmem_budget_bytes(tm, D, F, xs.dtype.itemsize)

    try:
        out = _build_call(rows_p, D, F, tm, xs.dtype, vmem_limit,
                          single_buffer_weights=True)(*args)
        out = jax.block_until_ready(out)
    except Exception:
        # pipeline_mode=pl.Buffered(1) not supported by this JAX/Mosaic build:
        # fall back to default (double-buffered) weight specs.
        out = _build_call(rows_p, D, F, tm, xs.dtype, vmem_limit,
                          single_buffer_weights=False)(*args)

    return out[:rows] if rows_p != rows else out


def reference_bf16_matmul(xs, ln_g, ln_b, w1, b1, w2, b2):
    """Pure-JAX reference matching the kernel's numerics (bf16 matmul
    operands, f32 accumulation, f32 LN/bias/relu/residual)."""
    x = xs.astype(jnp.float32)
    mean = jnp.mean(x, axis=-1, keepdims=True)
    var = jnp.mean((x - mean) ** 2, axis=-1, keepdims=True)
    xn = (x - mean) * jax.lax.rsqrt(var + LN_EPS) * ln_g + ln_b
    h = jnp.dot(xn.astype(jnp.bfloat16), w1.astype(jnp.bfloat16),
                preferred_element_type=jnp.float32) + b1
    h = jnp.maximum(h, 0.0)
    y = jnp.dot(h.astype(jnp.bfloat16), w2.astype(jnp.bfloat16),
                preferred_element_type=jnp.float32) + b2
    return (x + y).astype(xs.dtype)


if __name__ == "__main__":
    # Small shapes: decoder_embed_dim=128, decoder_ffn_embed_dim=256,
    # batch=2, seq=8 -> rows = 16.
    B, S, D, F = 2, 8, 128, 256
    key = jax.random.PRNGKey(0)
    k_x, k_w1, k_b1, k_w2, k_b2 = jax.random.split(key, 5)

    xs = jax.random.normal(k_x, (B, S, D), dtype=jnp.float32)
    xs2d = xs.reshape(B * S, D)

    # Deterministic synthetic parameters (not a checkpoint load).
    ln_g = jnp.ones((D,), jnp.float32)                         # LayerNorm weight
    ln_b = jnp.zeros((D,), jnp.float32)                        # LayerNorm bias
    w1 = jax.random.normal(k_w1, (D, F), jnp.float32) * 0.02   # ff1 (in, out)
    b1 = jax.random.normal(k_b1, (F,), jnp.float32) * 0.02
    b2 = jax.random.normal(k_b2, (D,), jnp.float32) * 0.02

    # Case 1: module-faithful init (ff2 weight zero-initialised, as in
    # BaseSublayer.__init__) -> output is xs + ff2_bias.
    w2_zero = jnp.zeros((F, D), jnp.float32)
    out0 = jax.block_until_ready(
        base_sublayer(xs2d, ln_g, ln_b, w1, b1, w2_zero, b2))
    ref0 = reference_bf16_matmul(xs2d, ln_g, ln_b, w1, b1, w2_zero, b2)
    assert jnp.allclose(out0, ref0, atol=1e-5, rtol=1e-5), "mismatch (zero ff2)"

    # Case 2: non-zero ff2 weight (post-training state) exercising the full
    # LN -> ff1 -> relu -> ff2 -> residual chain.
    w2 = jax.random.normal(k_w2, (F, D), jnp.float32) * 0.02
    out1 = jax.block_until_ready(
        base_sublayer(xs2d, ln_g, ln_b, w1, b1, w2, b2))
    ref1 = reference_bf16_matmul(xs2d, ln_g, ln_b, w1, b1, w2, b2)
    assert jnp.allclose(out1, ref1, atol=1e-4, rtol=1e-4), "mismatch (full chain)"

    print("KERNEL_OK")
</pallas_src>

<mosaic_0001>
module attributes {stable_mosaic.version = 11 : i64} {
  func.func @base_sublayer_kernel(%arg0: i32, %arg1: memref<16x128xf32, #tpu.memory_space<vmem>>, %arg2: memref<1x128xf32, #tpu.memory_space<vmem>>, %arg3: memref<1x128xf32, #tpu.memory_space<vmem>>, %arg4: memref<128x256xbf16, #tpu.memory_space<vmem>>, %arg5: memref<1x256xf32, #tpu.memory_space<vmem>>, %arg6: memref<256x128xbf16, #tpu.memory_space<vmem>>, %arg7: memref<1x128xf32, #tpu.memory_space<vmem>>, %arg8: memref<16x128xf32, #tpu.memory_space<vmem>>) attributes {dimension_semantics = [#tpu.dimension_semantics<parallel>], iteration_bounds = array<i64: 1>, scalar_prefetch = 0 : i64, scratch_operands = 0 : i64, tpu.core_type = #tpu.core_type<tc>, window_params = [{transform_indices = @transform_0, window_bounds = array<i64: 16, 128>}, {pipeline_mode = #tpu.pipeline_mode<synchronous>, transform_indices = @transform_1, window_bounds = array<i64: 1, 128>}, {pipeline_mode = #tpu.pipeline_mode<synchronous>, transform_indices = @transform_2, window_bounds = array<i64: 1, 128>}, {pipeline_mode = #tpu.pipeline_mode<synchronous>, transform_indices = @transform_3, window_bounds = array<i64: 128, 256>}, {pipeline_mode = #tpu.pipeline_mode<synchronous>, transform_indices = @transform_4, window_bounds = array<i64: 1, 256>}, {pipeline_mode = #tpu.pipeline_mode<synchronous>, transform_indices = @transform_5, window_bounds = array<i64: 256, 128>}, {pipeline_mode = #tpu.pipeline_mode<synchronous>, transform_indices = @transform_6, window_bounds = array<i64: 1, 128>}, {transform_indices = @transform_7, window_bounds = array<i64: 16, 128>}]} {
    %c0 = arith.constant 0 : index
    %c0_0 = arith.constant 0 : index
    %0 = vector.load %arg1[%c0, %c0_0] : memref<16x128xf32, #tpu.memory_space<vmem>>, vector<16x128xf32>
    %cst = arith.constant dense<0.000000e+00> : vector<16xf32>
    %1 = vector.multi_reduction <add>, %0, %cst [1] : vector<16x128xf32> to vector<16xf32>
    %2 = vector.shape_cast %1 : vector<16xf32> to vector<16x1xf32>
    %cst_1 = arith.constant 1.280000e+02 : f32
    %3 = vector.broadcast %cst_1 : f32 to vector<16x1xf32>
    %4 = arith.divf %2, %3 : vector<16x1xf32>
    %5 = vector.broadcast %4 : vector<16x1xf32> to vector<16x128xf32>
    %6 = arith.subf %0, %5 : vector<16x128xf32>
    %7 = arith.mulf %6, %6 : vector<16x128xf32>
    %cst_2 = arith.constant dense<0.000000e+00> : vector<16xf32>
    %8 = vector.multi_reduction <add>, %7, %cst_2 [1] : vector<16x128xf32> to vector<16xf32>
    %9 = vector.shape_cast %8 : vector<16xf32> to vector<16x1xf32>
    %cst_3 = arith.constant 1.280000e+02 : f32
    %10 = vector.broadcast %cst_3 : f32 to vector<16x1xf32>
    %11 = arith.divf %9, %10 : vector<16x1xf32>
    %cst_4 = arith.constant 9.99999974E-6 : f32
    %12 = vector.broadcast %cst_4 : f32 to vector<16x1xf32>
    %13 = arith.addf %11, %12 : vector<16x1xf32>
    %14 = math.rsqrt %13 : vector<16x1xf32>
    %15 = vector.broadcast %14 : vector<16x1xf32> to vector<16x128xf32>
    %16 = arith.mulf %6, %15 : vector<16x128xf32>
    %c0_5 = arith.constant 0 : index
    %c0_6 = arith.constant 0 : index
    %17 = vector.load %arg2[%c0_5, %c0_6] : memref<1x128xf32, #tpu.memory_space<vmem>>, vector<1x128xf32>
    %18 = vector.broadcast %17 : vector<1x128xf32> to vector<16x128xf32>
    %19 = arith.mulf %16, %18 : vector<16x128xf32>
    %c0_7 = arith.constant 0 : index
    %c0_8 = arith.constant 0 : index
    %20 = vector.load %arg3[%c0_7, %c0_8] : memref<1x128xf32, #tpu.memory_space<vmem>>, vector<1x128xf32>
    %21 = vector.broadcast %20 : vector<1x128xf32> to vector<16x128xf32>
    %22 = arith.addf %19, %21 : vector<16x128xf32>
    %23 = arith.truncf %22 : vector<16x128xf32> to vector<16x128xbf16>
    %c0_9 = arith.constant 0 : index
    %c0_10 = arith.constant 0 : index
    %24 = vector.load %arg4[%c0_9, %c0_10] : memref<128x256xbf16, #tpu.memory_space<vmem>>, vector<128x256xbf16>
    %cst_11 = arith.constant dense<0.000000e+00> : vector<16x256xf32>
    %25 = tpu.matmul %23, %24, %cst_11 {dimension_numbers = #tpu.dot_dimension_numbers<[1], [0], [0], [1], [0, 0, 1, 1], [], []>} : vector<16x128xbf16>, vector<128x256xbf16>, vector<16x256xf32> -> vector<16x256xf32>
    %c0_12 = arith.constant 0 : index
    %c0_13 = arith.constant 0 : index
    %26 = vector.load %arg5[%c0_12, %c0_13] : memref<1x256xf32, #tpu.memory_space<vmem>>, vector<1x256xf32>
    %27 = vector.broadcast %26 : vector<1x256xf32> to vector<16x256xf32>
    %28 = arith.addf %25, %27 : vector<16x256xf32>
    %cst_14 = arith.constant 0.000000e+00 : f32
    %29 = vector.broadcast %cst_14 : f32 to vector<16x256xf32>
    %30 = arith.maximumf %28, %29 : vector<16x256xf32>
    %31 = arith.truncf %30 : vector<16x256xf32> to vector<16x256xbf16>
    %c0_15 = arith.constant 0 : index
    %c0_16 = arith.constant 0 : index
    %32 = vector.load %arg6[%c0_15, %c0_16] : memref<256x128xbf16, #tpu.memory_space<vmem>>, vector<256x128xbf16>
    %cst_17 = arith.constant dense<0.000000e+00> : vector<16x128xf32>
    %33 = tpu.matmul %31, %32, %cst_17 {dimension_numbers = #tpu.dot_dimension_numbers<[1], [0], [0], [1], [0, 0, 1, 1], [], []>} : vector<16x256xbf16>, vector<256x128xbf16>, vector<16x128xf32> -> vector<16x128xf32>
    %c0_18 = arith.constant 0 : index
    %c0_19 = arith.constant 0 : index
    %34 = vector.load %arg7[%c0_18, %c0_19] : memref<1x128xf32, #tpu.memory_space<vmem>>, vector<1x128xf32>
    %35 = vector.broadcast %34 : vector<1x128xf32> to vector<16x128xf32>
    %36 = arith.addf %33, %35 : vector<16x128xf32>
    %c0_20 = arith.constant 0 : index
    %c0_21 = arith.constant 0 : index
    %37 = vector.load %arg1[%c0_20, %c0_21] : memref<16x128xf32, #tpu.memory_space<vmem>>, vector<16x128xf32>
    %38 = arith.addf %37, %36 : vector<16x128xf32>
    %c0_22 = arith.constant 0 : index
    %c0_23 = arith.constant 0 : index
    %39 = vector.load %arg8[%c0_22, %c0_23] : memref<16x128xf32, #tpu.memory_space<vmem>>, vector<16x128xf32>
    tpu.vector_store %arg8[%c0_22, %c0_23], %38 {strides = array<i32>} : memref<16x128xf32, #tpu.memory_space<vmem>>, vector<16x128xf32>,
    return
  }
  func.func @transform_0(%arg0: i32) -> (i32, i32) {
    %c0_i32 = arith.constant 0 : i32
    %c0_i32_0 = arith.constant 0 : i32
    return %arg0, %c0_i32 : i32, i32
  }
  func.func @transform_1(%arg0: i32) -> (i32, i32) {
    %c0_i32 = arith.constant 0 : i32
    %c0_i32_0 = arith.constant 0 : i32
    %c0_i32_1 = arith.constant 0 : i32
    return %c0_i32, %c0_i32_0 : i32, i32
  }
  func.func @transform_2(%arg0: i32) -> (i32, i32) {
    %c0_i32 = arith.constant 0 : i32
    %c0_i32_0 = arith.constant 0 : i32
    %c0_i32_1 = arith.constant 0 : i32
    return %c0_i32, %c0_i32_0 : i32, i32
  }
  func.func @transform_3(%arg0: i32) -> (i32, i32) {
    %c0_i32 = arith.constant 0 : i32
    %c0_i32_0 = arith.constant 0 : i32
    %c0_i32_1 = arith.constant 0 : i32
    return %c0_i32, %c0_i32_0 : i32, i32
  }
  func.func @transform_4(%arg0: i32) -> (i32, i32) {
    %c0_i32 = arith.constant 0 : i32
    %c0_i32_0 = arith.constant 0 : i32
    %c0_i32_1 = arith.constant 0 : i32
    return %c0_i32, %c0_i32_0 : i32, i32
  }
  func.func @transform_5(%arg0: i32) -> (i32, i32) {
    %c0_i32 = arith.constant 0 : i32
    %c0_i32_0 = arith.constant 0 : i32
    %c0_i32_1 = arith.constant 0 : i32
    return %c0_i32, %c0_i32_0 : i32, i32
  }
  func.func @transform_6(%arg0: i32) -> (i32, i32) {
    %c0_i32 = arith.constant 0 : i32
    %c0_i32_0 = arith.constant 0 : i32
    %c0_i32_1 = arith.constant 0 : i32
    return %c0_i32, %c0_i32_0 : i32, i32
  }
  func.func @transform_7(%arg0: i32) -> (i32, i32) {
    %c0_i32 = arith.constant 0 : i32
    %c0_i32_0 = arith.constant 0 : i32
    return %arg0, %c0_i32 : i32, i32
  }
}

module attributes {stable_mosaic.version = 11 : i64} {
  func.func @base_sublayer_kernel(%arg0: i32, %arg1: memref<16x128xf32, #tpu.memory_space<vmem>>, %arg2: memref<1x128xf32, #tpu.memory_space<vmem>>, %arg3: memref<1x128xf32, #tpu.memory_space<vmem>>, %arg4: memref<128x256xbf16, #tpu.memory_space<vmem>>, %arg5: memref<1x256xf32, #tpu.memory_space<vmem>>, %arg6: memref<256x128xbf16, #tpu.memory_space<vmem>>, %arg7: memref<1x128xf32, #tpu.memory_space<vmem>>, %arg8: memref<16x128xf32, #tpu.memory_space<vmem>>) attributes {dimension_semantics = [#tpu.dimension_semantics<parallel>], iteration_bounds = array<i64: 1>, scalar_prefetch = 0 : i64, scratch_operands = 0 : i64, tpu.core_type = #tpu.core_type<tc>, window_params = [{transform_indices = @transform_0, window_bounds = array<i64: 16, 128>}, {pipeline_mode = #tpu.pipeline_mode<synchronous>, transform_indices = @transform_1, window_bounds = array<i64: 1, 128>}, {pipeline_mode = #tpu.pipeline_mode<synchronous>, transform_indices = @transform_2, window_bounds = array<i64: 1, 128>}, {pipeline_mode = #tpu.pipeline_mode<synchronous>, transform_indices = @transform_3, window_bounds = array<i64: 128, 256>}, {pipeline_mode = #tpu.pipeline_mode<synchronous>, transform_indices = @transform_4, window_bounds = array<i64: 1, 256>}, {pipeline_mode = #tpu.pipeline_mode<synchronous>, transform_indices = @transform_5, window_bounds = array<i64: 256, 128>}, {pipeline_mode = #tpu.pipeline_mode<synchronous>, transform_indices = @transform_6, window_bounds = array<i64: 1, 128>}, {transform_indices = @transform_7, window_bounds = array<i64: 16, 128>}]} {
    %c0 = arith.constant 0 : index
    %c0_0 = arith.constant 0 : index
    %0 = vector.load %arg1[%c0, %c0_0] : memref<16x128xf32, #tpu.memory_space<vmem>>, vector<16x128xf32>
    %cst = arith.constant dense<0.000000e+00> : vector<16xf32>
    %1 = vector.multi_reduction <add>, %0, %cst [1] : vector<16x128xf32> to vector<16xf32>
    %2 = vector.shape_cast %1 : vector<16xf32> to vector<16x1xf32>
    %cst_1 = arith.constant 1.280000e+02 : f32
    %3 = vector.broadcast %cst_1 : f32 to vector<16x1xf32>
    %4 = arith.divf %2, %3 : vector<16x1xf32>
    %5 = vector.broadcast %4 : vector<16x1xf32> to vector<16x128xf32>
    %6 = arith.subf %0, %5 : vector<16x128xf32>
    %7 = arith.mulf %6, %6 : vector<16x128xf32>
    %cst_2 = arith.constant dense<0.000000e+00> : vector<16xf32>
    %8 = vector.multi_reduction <add>, %7, %cst_2 [1] : vector<16x128xf32> to vector<16xf32>
    %9 = vector.shape_cast %8 : vector<16xf32> to vector<16x1xf32>
    %cst_3 = arith.constant 1.280000e+02 : f32
    %10 = vector.broadcast %cst_3 : f32 to vector<16x1xf32>
    %11 = arith.divf %9, %10 : vector<16x1xf32>
    %cst_4 = arith.constant 9.99999974E-6 : f32
    %12 = vector.broadcast %cst_4 : f32 to vector<16x1xf32>
    %13 = arith.addf %11, %12 : vector<16x1xf32>
    %14 = math.rsqrt %13 : vector<16x1xf32>
    %15 = vector.broadcast %14 : vector<16x1xf32> to vector<16x128xf32>
    %16 = arith.mulf %6, %15 : vector<16x128xf32>
    %c0_5 = arith.constant 0 : index
    %c0_6 = arith.constant 0 : index
    %17 = vector.load %arg2[%c0_5, %c0_6] : memref<1x128xf32, #tpu.memory_space<vmem>>, vector<1x128xf32>
    %18 = vector.broadcast %17 : vector<1x128xf32> to vector<16x128xf32>
    %19 = arith.mulf %16, %18 : vector<16x128xf32>
    %c0_7 = arith.constant 0 : index
    %c0_8 = arith.constant 0 : index
    %20 = vector.load %arg3[%c0_7, %c0_8] : memref<1x128xf32, #tpu.memory_space<vmem>>, vector<1x128xf32>
    %21 = vector.broadcast %20 : vector<1x128xf32> to vector<16x128xf32>
    %22 = arith.addf %19, %21 : vector<16x128xf32>
    %23 = arith.truncf %22 : vector<16x128xf32> to vector<16x128xbf16>
    %c0_9 = arith.constant 0 : index
    %c0_10 = arith.constant 0 : index
    %24 = vector.load %arg4[%c0_9, %c0_10] : memref<128x256xbf16, #tpu.memory_space<vmem>>, vector<128x256xbf16>
    %cst_11 = arith.constant dense<0.000000e+00> : vector<16x256xf32>
    %25 = tpu.matmul %23, %24, %cst_11 {dimension_numbers = #tpu.dot_dimension_numbers<[1], [0], [0], [1], [0, 0, 1, 1], [], []>} : vector<16x128xbf16>, vector<128x256xbf16>, vector<16x256xf32> -> vector<16x256xf32>
    %c0_12 = arith.constant 0 : index
    %c0_13 = arith.constant 0 : index
    %26 = vector.load %arg5[%c0_12, %c0_13] : memref<1x256xf32, #tpu.memory_space<vmem>>, vector<1x256xf32>
    %27 = vector.broadcast %26 : vector<1x256xf32> to vector<16x256xf32>
    %28 = arith.addf %25, %27 : vector<16x256xf32>
    %cst_14 = arith.constant 0.000000e+00 : f32
    %29 = vector.broadcast %cst_14 : f32 to vector<16x256xf32>
    %30 = arith.maximumf %28, %29 : vector<16x256xf32>
    %31 = arith.truncf %30 : vector<16x256xf32> to vector<16x256xbf16>
    %c0_15 = arith.constant 0 : index
    %c0_16 = arith.constant 0 : index
    %32 = vector.load %arg6[%c0_15, %c0_16] : memref<256x128xbf16, #tpu.memory_space<vmem>>, vector<256x128xbf16>
    %cst_17 = arith.constant dense<0.000000e+00> : vector<16x128xf32>
    %33 = tpu.matmul %31, %32, %cst_17 {dimension_numbers = #tpu.dot_dimension_numbers<[1], [0], [0], [1], [0, 0, 1, 1], [], []>} : vector<16x256xbf16>, vector<256x128xbf16>, vector<16x128xf32> -> vector<16x128xf32>
    %c0_18 = arith.constant 0 : index
    %c0_19 = arith.constant 0 : index
    %34 = vector.load %arg7[%c0_18, %c0_19] : memref<1x128xf32, #tpu.memory_space<vmem>>, vector<1x128xf32>
    %35 = vector.broadcast %34 : vector<1x128xf32> to vector<16x128xf32>
    %36 = arith.addf %33, %35 : vector<16x128xf32>
    %c0_20 = arith.constant 0 : index
    %c0_21 = arith.constant 0 : index
    %37 = vector.load %arg1[%c0_20, %c0_21] : memref<16x128xf32, #tpu.memory_space<vmem>>, vector<16x128xf32>
    %38 = arith.addf %37, %36 : vector<16x128xf32>
    %c0_22 = arith.constant 0 : index
    %c0_23 = arith.constant 0 : index
    %39 = vector.load %arg8[%c0_22, %c0_23] : memref<16x128xf32, #tpu.memory_space<vmem>>, vector<16x128xf32>
    tpu.vector_store %arg8[%c0_22, %c0_23], %38 {strides = array<i32>} : memref<16x128xf32, #tpu.memory_space<vmem>>, vector<16x128xf32>,
    return
  }
  func.func @transform_0(%arg0: i32) -> (i32, i32) {
    %c0_i32 = arith.constant 0 : i32
    %c0_i32_0 = arith.constant 0 : i32
    return %arg0, %c0_i32 : i32, i32
  }
  func.func @transform_1(%arg0: i32) -> (i32, i32) {
    %c0_i32 = arith.constant 0 : i32
    %c0_i32_0 = arith.constant 0 : i32
    %c0_i32_1 = arith.constant 0 : i32
    return %c0_i32, %c0_i32_0 : i32, i32
  }
  func.func @transform_2(%arg0: i32) -> (i32, i32) {
    %c0_i32 = arith.constant 0 : i32
    %c0_i32_0 = arith.constant 0 : i32
    %c0_i32_1 = arith.constant 0 : i32
    return %c0_i32, %c0_i32_0 : i32, i32
  }
  func.func @transform_3(%arg0: i32) -> (i32, i32) {
    %c0_i32 = arith.constant 0 : i32
    %c0_i32_0 = arith.constant 0 : i32
    %c0_i32_1 = arith.constant 0 : i32
    return %c0_i32, %c0_i32_0 : i32, i32
  }
  func.func @transform_4(%arg0: i32) -> (i32, i32) {
    %c0_i32 = arith.constant 0 : i32
    %c0_i32_0 = arith.constant 0 : i32
    %c0_i32_1 = arith.constant 0 : i32
    return %c0_i32, %c0_i32_0 : i32, i32
  }
  func.func @transform_5(%arg0: i32) -> (i32, i32) {
    %c0_i32 = arith.constant 0 : i32
    %c0_i32_0 = arith.constant 0 : i32
    %c0_i32_1 = arith.constant 0 : i32
    return %c0_i32, %c0_i32_0 : i32, i32
  }
  func.func @transform_6(%arg0: i32) -> (i32, i32) {
    %c0_i32 = arith.constant 0 : i32
    %c0_i32_0 = arith.constant 0 : i32
    %c0_i32_1 = arith.constant 0 : i32
    return %c0_i32, %c0_i32_0 : i32, i32
  }
  func.func @transform_7(%arg0: i32) -> (i32, i32) {
    %c0_i32 = arith.constant 0 : i32
    %c0_i32_0 = arith.constant 0 : i32
    return %arg0, %c0_i32 : i32, i32
  }
}

</mosaic_0001>

<llo_original>
// kernel: tpu_custom_call.1
$region0: #{tpu_custom_call.1}
  #allocation0 [shape = 'u32[]', space=smem, size = 0x4, offset = 0x4, fixed_abs, tag = 'smem constant byte address 0x4 - core index']
  #allocation1 [shape = 'u32[72,128]{1,0:T(1,128)}', space=vmem, size = 0x9000, scoped, tag = 'internal scratch']
  %s0 = inlined_call_operand.hbm [shape: f32[16,128], index: 0, kind: input, shape index: {}]
  %s1 = inlined_call_operand.hbm [shape: f32[1,128], index: 1, kind: input, shape index: {}]
  %s2 = inlined_call_operand.vmem [shape: f32[1,128], index: 2, kind: input, shape index: {}]
  %s3 = inlined_call_operand.hbm [shape: bf16[128,256], index: 3, kind: input, shape index: {}]
  %s4 = inlined_call_operand.vmem [shape: f32[1,256], index: 4, kind: input, shape index: {}]
  %s5 = inlined_call_operand.hbm [shape: bf16[256,128], index: 5, kind: input, shape index: {}]
  %s6 = inlined_call_operand.vmem [shape: f32[1,128], index: 6, kind: input, shape index: {}]
  %s7 = inlined_call_operand.hbm [shape: f32[16,128], index: 7, kind: output, shape index: {}]
  %s8 = sld [smem:[#allocation0]]
  $region54: #{tpu_custom_call.1} parent=0
    _
  %s10 = ssub.s32 1, %s8
  %s11 = scalar_select 0, %s10, %s8
  $region1: #{tpu_custom_call.1} parent=0
    #allocation2 [shape = 'u8[8192]{0}', space=vmem, size = 0x2000, scoped, tag = 'input window, operand 0, single buffered']
    #allocation3 [shape = 's32[1]{0}', space=sflag, size = 0x4, scoped, tag = 'scoped memory for tpu_custom_call.1']
    #allocation4 [shape = 's32[1]{0}', space=sflag, size = 0x4, scoped, tag = 'scoped memory for tpu_custom_call.1']
    #allocation5 [shape = 'u8[512]{0}', space=vmem, size = 0x400, scoped, tag = 'input window, operand 1, single buffered']
    #allocation6 [shape = 's32[1]{0}', space=sflag, size = 0x4, scoped, tag = 'scoped memory for tpu_custom_call.1']
    #allocation7 [shape = 'u8[65536]{0}', space=vmem, size = 0x10000, scoped, tag = 'input window, operand 3, single buffered']
    #allocation8 [shape = 'u8[65536]{0}', space=vmem, size = 0x10000, scoped, tag = 'input window, operand 5, single buffered']
    #allocation9 [shape = 's32[1]{0}', space=sflag, size = 0x4, scoped, tag = 'scoped memory for tpu_custom_call.1']
    #allocation10 [shape = 'u8[8192]{0}', space=vmem, size = 0x2000, scoped, tag = 'output window, operand 0, single buffered']
    %12 = vsyncpa [#allocation3], 0
    %13 = vsyncpa [#allocation6], 0
    %14 = vsyncpa [#allocation9], 0
    %15 = vsyncpa [#allocation4], 0
    // Predicated region
    $region2: #{tpu_custom_call.1} parent=1 // pred_check
      _
    $region3: #{tpu_custom_call.1} parent=1 // pred_check_branch
      %17 = sbr.rel (0) target = $region5
    $region4: #{tpu_custom_call.1} parent=1 // pred_region
      %19 = vsyncadd [#allocation3], 0
      %s20 = sshll.u32 %s0, 4
      %s21 = int_to_ptr.hbm [resolvable:$true] %s20
      %s22 = sshll.u32 [#allocation2], 4
      %s23 = int_to_ptr.vmem [resolvable:$true] %s22
      %28 = dma.hbm_to_vmem [thread:$0]  %s21, 256, %s23, [#allocation3], 128, 128, 8
    $region5: #{tpu_custom_call.1} parent=1 // pred_fallthru
      _
    // Predicated region
    $region6: #{tpu_custom_call.1} parent=1 // pred_check
      _
    $region7: #{tpu_custom_call.1} parent=1 // pred_check_branch
      %30 = sbr.rel (0) target = $region9
    $region8: #{tpu_custom_call.1} parent=1 // pred_region
      %32 = vsyncadd [#allocation6], 0
      %s34 = sshll.u32 %s1, 4
      %s35 = int_to_ptr.hbm [resolvable:$true] %s34
      %s36 = sshll.u32 [#allocation5], 4
      %s37 = int_to_ptr.vmem [resolvable:$true] %s36
      %39 = dma.hbm_to_vmem [thread:$0]  %s35, 16, %s37, [#allocation6]
    $region9: #{tpu_custom_call.1} parent=1 // pred_fallthru
      _
    // Predicated region
    $region10: #{tpu_custom_call.1} parent=1 // pred_check
      _
    $region11: #{tpu_custom_call.1} parent=1 // pred_check_branch
      %41 = sbr.rel (0) target = $region13
    $region12: #{tpu_custom_call.1} parent=1 // pred_region
      _
    $region13: #{tpu_custom_call.1} parent=1 // pred_fallthru
      _
    // Predicated region
    $region14: #{tpu_custom_call.1} parent=1 // pred_check
      _
    $region15: #{tpu_custom_call.1} parent=1 // pred_check_branch
      %43 = sbr.rel (0) target = $region17
    $region16: #{tpu_custom_call.1} parent=1 // pred_region
      %45 = vsyncadd [#allocation6], 0
      %s46 = sshll.u32 %s3, 4
      %s47 = int_to_ptr.hbm [resolvable:$true] %s46
      %s48 = sshll.u32 [#allocation7], 4
      %s49 = int_to_ptr.vmem [resolvable:$true] %s48
      %54 = dma.hbm_to_vmem [thread:$0]  %s47, 2048, %s49, [#allocation6], 128, 128, 8
    $region17: #{tpu_custom_call.1} parent=1 // pred_fallthru
      _
    // Predicated region
    $region18: #{tpu_custom_call.1} parent=1 // pred_check
      _
    $region19: #{tpu_custom_call.1} parent=1 // pred_check_branch
      %56 = sbr.rel (0) target = $region21
    $region20: #{tpu_custom_call.1} parent=1 // pred_region
      _
    $region21: #{tpu_custom_call.1} parent=1 // pred_fallthru
      _
    // Predicated region
    $region22: #{tpu_custom_call.1} parent=1 // pred_check
      _
    $region23: #{tpu_custom_call.1} parent=1 // pred_check_branch
      %58 = sbr.rel (0) target = $region25
    $region24: #{tpu_custom_call.1} parent=1 // pred_region
      %60 = vsyncadd [#allocation9], 0
      %s61 = sshll.u32 %s5, 4
      %s62 = int_to_ptr.hbm [resolvable:$true] %s61
      %s63 = sshll.u32 [#allocation8], 4
      %s64 = int_to_ptr.vmem [resolvable:$true] %s63
      %69 = dma.hbm_to_vmem [thread:$0]  %s62, 2048, %s64, [#allocation9], 64, 64, 4
    $region25: #{tpu_custom_call.1} parent=1 // pred_fallthru
      _
    // Predicated region
    $region26: #{tpu_custom_call.1} parent=1 // pred_check
      _
    $region27: #{tpu_custom_call.1} parent=1 // pred_check_branch
      %71 = sbr.rel (0) target = $region29
    $region28: #{tpu_custom_call.1} parent=1 // pred_region
      _
    $region29: #{tpu_custom_call.1} parent=1 // pred_fallthru
      _
    // Predicated region
    $region30: #{tpu_custom_call.1} parent=1 // pred_check
      _
    $region31: #{tpu_custom_call.1} parent=1 // pred_check_branch
      %73 = sbr.rel (0) target = $region33
    $region32: #{tpu_custom_call.1} parent=1 // pred_region
      %75 = dma.done [#allocation3], 256
    $region33: #{tpu_custom_call.1} parent=1 // pred_fallthru
      _
    // Predicated region
    $region34: #{tpu_custom_call.1} parent=1 // pred_check
      _
    $region35: #{tpu_custom_call.1} parent=1 // pred_check_branch
      %77 = sbr.rel (0) target = $region37
    $region36: #{tpu_custom_call.1} parent=1 // pred_region
      %79 = dma.done [#allocation6], 16
    $region37: #{tpu_custom_call.1} parent=1 // pred_fallthru
      _
    // Predicated region
    $region38: #{tpu_custom_call.1} parent=1 // pred_check
      _
    $region39: #{tpu_custom_call.1} parent=1 // pred_check_branch
      %81 = sbr.rel (0) target = $region41
    $region40: #{tpu_custom_call.1} parent=1 // pred_region
      %83 = dma.done [#allocation6], 2048
    $region41: #{tpu_custom_call.1} parent=1 // pred_fallthru
      _
    // Predicated region
    $region42: #{tpu_custom_call.1} parent=1 // pred_check
      _
    $region43: #{tpu_custom_call.1} parent=1 // pred_check_branch
      %85 = sbr.rel (0) target = $region45
    $region44: #{tpu_custom_call.1} parent=1 // pred_region
      %87 = dma.done [#allocation9], 2048
    $region45: #{tpu_custom_call.1} parent=1 // pred_fallthru
      _
    %v88 = vld [vmem:[#allocation2] sm:$0xff]
    %v89 = vld [vmem:[#allocation2 + $0x8] sm:$0xff]
    %90 = vadd.xlane.f32.xlu0 %v88
    %v91 = vpop.xlane.xlu0 %90
    %92 = vadd.xlane.f32.xlu0 %v89
    %v93 = vpop.xlane.xlu0 %92
    %v94 = vrcp.pop 128.0
    %v95 = vmul.f32 128.0, %v94
    %v96 = vsub.f32 1.0, %v95
    %v97 = vmul.f32 %v94, %v96
    %v98 = vadd.f32 %v94, %v97
    %vm99 = vweird.f32 %v94
    %v100 = vsel %vm99, %v94, %v98
    %v101 = vmul.f32 %v91, %v100
    %v102 = vmul.f32 %v93, %v100
    %v103 = vsub.f32 %v88, %v101
    %v104 = vsub.f32 %v89, %v102
    %v105 = vmul.f32 %v103, %v103
    %v106 = vmul.f32 %v104, %v104
    %107 = vadd.xlane.f32.xlu0 %v105
    %v108 = vpop.xlane.xlu0 %107
    %109 = vadd.xlane.f32.xlu0 %v106
    %v110 = vpop.xlane.xlu0 %109
    %v111 = vmul.f32 %v108, %v100
    %v112 = vmul.f32 %v110, %v100
    %v113 = vadd.f32 %v111, 1e-05
    %v114 = vadd.f32 %v112, 1e-05
    %v115 = vrsqrt.pop %v113
    %v116 = vmul.f32 %v115, %v113
    %v117 = vmul.f32 %v116, %v115
    %v118 = vmul.f32 0.5, %v117
    %v119 = vsub.f32 1.5, %v118
    %v120 = vmul.f32 %v115, %v119
    %vm121 = vweird.f32 %v113
    %vm122 = vweird.f32 %v115
    %vm123 = vmor %vm121, %vm122
    %v124 = vsel %vm123, %v115, %v120
    %v125 = vrsqrt.pop %v114
    %v126 = vmul.f32 %v125, %v114
    %v127 = vmul.f32 %v126, %v125
    %v128 = vmul.f32 0.5, %v127
    %v129 = vsub.f32 1.5, %v128
    %v130 = vmul.f32 %v125, %v129
    %vm131 = vweird.f32 %v114
    %vm132 = vweird.f32 %v125
    %vm133 = vmor %vm131, %vm132
    %v134 = vsel %vm133, %v125, %v130
    %v135 = vmul.f32 %v103, %v124
    %v136 = vmul.f32 %v104, %v134
    %v137 = vld [vmem:[#allocation5] sm:$0x1]
    %v139 = vperm.slane %v137, 0
    %v141 = vmul.f32 %v135, %v139
    %v142 = vmul.f32 %v136, %v139
    %v143 = vld [vmem:[%s2] sm:$0x1]
    %v145 = vperm.slane %v143, 0
    %v147 = vadd.f32 %v141, %v145
    %v148 = vadd.f32 %v142, %v145
    %v149 = vpack.c.bf16 %v148, %v147
    %v150 = vld [vmem:[#allocation7] sm:$0xff]
    %v151 = vld [vmem:[#allocation7 + $0x8] sm:$0xff]
    %v152 = vld [vmem:[#allocation7 + $0x10] sm:$0xff]
    %v153 = vld [vmem:[#allocation7 + $0x18] sm:$0xff]
    %v154 = vld [vmem:[#allocation7 + $0x20] sm:$0xff]
    %v155 = vld [vmem:[#allocation7 + $0x28] sm:$0xff]
    %v156 = vld [vmem:[#allocation7 + $0x30] sm:$0xff]
    %v157 = vld [vmem:[#allocation7 + $0x38] sm:$0xff]
    %v158 = vld [vmem:[#allocation7 + $0x40] sm:$0xff]
    %v159 = vld [vmem:[#allocation7 + $0x48] sm:$0xff]
    %v160 = vld [vmem:[#allocation7 + $0x50] sm:$0xff]
    %v161 = vld [vmem:[#allocation7 + $0x58] sm:$0xff]
    %v162 = vld [vmem:[#allocation7 + $0x60] sm:$0xff]
    %v163 = vld [vmem:[#allocation7 + $0x68] sm:$0xff]
    %v164 = vld [vmem:[#allocation7 + $0x70] sm:$0xff]
    %v165 = vld [vmem:[#allocation7 + $0x78] sm:$0xff]
    %v166 = vld [vmem:[%s4] sm:$0x3]
    %v168 = vperm.slane %v166, 0
    %v169 = vperm.slane %v166, 1
    %v188 = vunpack.c.l.b16 %v150
    %v189 = vunpack.c.h.b16 %v150
    %v190 = vunpack.c.l.b16 %v151
    %v191 = vunpack.c.h.b16 %v151
    %v192 = vunpack.c.l.b16 %v152
    %v193 = vunpack.c.h.b16 %v152
    %v194 = vunpack.c.l.b16 %v153
    %v195 = vunpack.c.h.b16 %v153
    %v196 = vunpack.c.l.b16 %v154
    %v197 = vunpack.c.h.b16 %v154
    %v198 = vunpack.c.l.b16 %v155
    %v199 = vunpack.c.h.b16 %v155
    %v200 = vunpack.c.l.b16 %v156
    %v201 = vunpack.c.h.b16 %v156
    %v202 = vunpack.c.l.b16 %v157
    %v203 = vunpack.c.h.b16 %v157
    %v204 = vunpack.c.l.b16 %v158
    %v205 = vunpack.c.h.b16 %v158
    %v206 = vunpack.c.l.b16 %v159
    %v207 = vunpack.c.h.b16 %v159
    %v208 = vunpack.c.l.b16 %v160
    %v209 = vunpack.c.h.b16 %v160
    %v210 = vunpack.c.l.b16 %v161
    %v211 = vunpack.c.h.b16 %v161
    %v212 = vunpack.c.l.b16 %v162
    %v213 = vunpack.c.h.b16 %v162
    %v214 = vunpack.c.l.b16 %v163
    %v215 = vunpack.c.h.b16 %v163
    %v216 = vunpack.c.l.b16 %v164
    %v217 = vunpack.c.h.b16 %v164
    %v218 = vunpack.c.l.b16 %v165
    %v219 = vunpack.c.h.b16 %v165
    %v220 = vpack.c.b16 %v190, %v188
    %v221 = vpack.c.b16 %v191, %v189
    %v222 = vpack.c.b16 %v194, %v192
    %v223 = vpack.c.b16 %v195, %v193
    %v224 = vpack.c.b16 %v198, %v196
    %v225 = vpack.c.b16 %v199, %v197
    %v226 = vpack.c.b16 %v202, %v200
    %v227 = vpack.c.b16 %v203, %v201
    %v228 = vpack.c.b16 %v206, %v204
    %v229 = vpack.c.b16 %v207, %v205
    %v230 = vpack.c.b16 %v210, %v208
    %v231 = vpack.c.b16 %v211, %v209
    %v232 = vpack.c.b16 %v214, %v212
    %v233 = vpack.c.b16 %v215, %v213
    %v234 = vpack.c.b16 %v218, %v216
    %v235 = vpack.c.b16 %v219, %v217
    %252 = vmatpush.bf16.msra.mxu0 %v234
    %253 = vmatpush.bf16.msra.mxu0 %v232
    %254 = vmatpush.bf16.msra.mxu0 %v230
    %255 = vmatpush.bf16.msra.mxu0 %v228
    %256 = vmatpush.bf16.msra.mxu0 %v226
    %257 = vmatpush.bf16.msra.mxu0 %v224
    %258 = vmatpush.bf16.msra.mxu0 %v222
    %259 = vmatpush.bf16.msra.mxu0 %v220
    %260 = vmatmul.bf16.gmra.mxu0 %v149
    %v261 = vpop.f32.mrf.mxu0
    %v262 = vadd.f32 %v168, %v261
    %v263 = vpop.f32.mrf.mxu0
    %v264 = vadd.f32 %v168, %v263
    %265 = vdwg.mxu0
    %266 = vmatpush.bf16.msra.mxu0 %v235
    %267 = vmatpush.bf16.msra.mxu0 %v233
    %268 = vmatpush.bf16.msra.mxu0 %v231
    %269 = vmatpush.bf16.msra.mxu0 %v229
    %270 = vmatpush.bf16.msra.mxu0 %v227
    %271 = vmatpush.bf16.msra.mxu0 %v225
    %272 = vmatpush.bf16.msra.mxu0 %v223
    %273 = vmatpush.bf16.msra.mxu0 %v221
    %274 = vmatmul.bf16.gmra.mxu0 %v149
    %v275 = vpop.f32.mrf.mxu0
    %v276 = vadd.f32 %v169, %v275
    %v277 = vpop.f32.mrf.mxu0
    %v278 = vadd.f32 %v169, %v277
    %279 = vdwg.mxu0
    %v280 = vmax.f32 %v262, 0.0
    %v281 = vmax.f32 %v276, 0.0
    %v282 = vmax.f32 %v264, 0.0
    %v283 = vmax.f32 %v278, 0.0
    %v284 = vpack.c.bf16 %v282, %v280
    %v285 = vpack.c.bf16 %v283, %v281
    %v286 = vld [vmem:[#allocation8] sm:$0xf]
    %v287 = vld [vmem:[#allocation8 + $0x4] sm:$0xf]
    %v288 = vld [vmem:[#allocation8 + $0x8] sm:$0xf]
    %v289 = vld [vmem:[#allocation8 + $0xc] sm:$0xf]
    %v290 = vld [vmem:[#allocation8 + $0x10] sm:$0xf]
    %v291 = vld [vmem:[#allocation8 + $0x14] sm:$0xf]
    %v292 = vld [vmem:[#allocation8 + $0x18] sm:$0xf]
    %v293 = vld [vmem:[#allocation8 + $0x1c] sm:$0xf]
    %v294 = vld [vmem:[#allocation8 + $0x20] sm:$0xf]
    %v295 = vld [vmem:[#allocation8 + $0x24] sm:$0xf]
    %v296 = vld [vmem:[#allocation8 + $0x28] sm:$0xf]
    %v297 = vld [vmem:[#allocation8 + $0x2c] sm:$0xf]
    %v298 = vld [vmem:[#allocation8 + $0x30] sm:$0xf]
    %v299 = vld [vmem:[#allocation8 + $0x34] sm:$0xf]
    %v300 = vld [vmem:[#allocation8 + $0x38] sm:$0xf]
    %v301 = vld [vmem:[#allocation8 + $0x3c] sm:$0xf]
    %v302 = vld [vmem:[#allocation8 + $0x40] sm:$0xf]
    %v303 = vld [vmem:[#allocation8 + $0x44] sm:$0xf]
    %v304 = vld [vmem:[#allocation8 + $0x48] sm:$0xf]
    %v305 = vld [vmem:[#allocation8 + $0x4c] sm:$0xf]
    %v306 = vld [vmem:[#allocation8 + $0x50] sm:$0xf]
    %v307 = vld [vmem:[#allocation8 + $0x54] sm:$0xf]
    %v308 = vld [vmem:[#allocation8 + $0x58] sm:$0xf]
    %v309 = vld [vmem:[#allocation8 + $0x5c] sm:$0xf]
    %v310 = vld [vmem:[#allocation8 + $0x60] sm:$0xf]
    %v311 = vld [vmem:[#allocation8 + $0x64] sm:$0xf]
    %v312 = vld [vmem:[#allocation8 + $0x68] sm:$0xf]
    %v313 = vld [vmem:[#allocation8 + $0x6c] sm:$0xf]
    %v314 = vld [vmem:[#allocation8 + $0x70] sm:$0xf]
    %v315 = vld [vmem:[#allocation8 + $0x74] sm:$0xf]
    %v316 = vld [vmem:[#allocation8 + $0x78] sm:$0xf]
    %v317 = vld [vmem:[#allocation8 + $0x7c] sm:$0xf]
    %v318 = vld [vmem:[%s6] sm:$0x1]
    %v320 = vperm.slane %v318, 0
    %v354 = vunpack.c.l.b16 %v286
    %v355 = vunpack.c.l.b16 %v287
    %v356 = vunpack.c.l.b16 %v288
    %v357 = vunpack.c.l.b16 %v289
    %v358 = vunpack.c.l.b16 %v290
    %v359 = vunpack.c.l.b16 %v291
    %v360 = vunpack.c.l.b16 %v292
    %v361 = vunpack.c.l.b16 %v293
    %v362 = vunpack.c.l.b16 %v294
    %v363 = vunpack.c.l.b16 %v295
    %v364 = vunpack.c.l.b16 %v296
    %v365 = vunpack.c.l.b16 %v297
    %v366 = vunpack.c.l.b16 %v298
    %v367 = vunpack.c.l.b16 %v299
    %v368 = vunpack.c.l.b16 %v300
    %v369 = vunpack.c.l.b16 %v301
    %v370 = vunpack.c.l.b16 %v302
    %v371 = vunpack.c.l.b16 %v303
    %v372 = vunpack.c.l.b16 %v304
    %v373 = vunpack.c.l.b16 %v305
    %v374 = vunpack.c.l.b16 %v306
    %v375 = vunpack.c.l.b16 %v307
    %v376 = vunpack.c.l.b16 %v308
    %v377 = vunpack.c.l.b16 %v309
    %v378 = vunpack.c.l.b16 %v310
    %v379 = vunpack.c.l.b16 %v311
    %v380 = vunpack.c.l.b16 %v312
    %v381 = vunpack.c.l.b16 %v313
    %v382 = vunpack.c.l.b16 %v314
    %v383 = vunpack.c.l.b16 %v315
    %v384 = vunpack.c.l.b16 %v316
    %v385 = vunpack.c.l.b16 %v317
    %v386 = vpack.c.b16 %v355, %v354
    %v387 = vpack.c.b16 %v357, %v356
    %v388 = vpack.c.b16 %v359, %v358
    %v389 = vpack.c.b16 %v361, %v360
    %v390 = vpack.c.b16 %v363, %v362
    %v391 = vpack.c.b16 %v365, %v364
    %v392 = vpack.c.b16 %v367, %v366
    %v393 = vpack.c.b16 %v369, %v368
    %v394 = vpack.c.b16 %v371, %v370
    %v395 = vpack.c.b16 %v373, %v372
    %v396 = vpack.c.b16 %v375, %v374
    %v397 = vpack.c.b16 %v377, %v376
    %v398 = vpack.c.b16 %v379, %v378
    %v399 = vpack.c.b16 %v381, %v380
    %v400 = vpack.c.b16 %v383, %v382
    %v401 = vpack.c.b16 %v385, %v384
    %418 = vmatpush.bf16.msra.mxu0 %v393
    %419 = vmatpush.bf16.msra.mxu0 %v392
    %420 = vmatpush.bf16.msra.mxu0 %v391
    %421 = vmatpush.bf16.msra.mxu0 %v390
    %422 = vmatpush.bf16.msra.mxu0 %v389
    %423 = vmatpush.bf16.msra.mxu0 %v388
    %424 = vmatpush.bf16.msra.mxu0 %v387
    %425 = vmatpush.bf16.msra.mxu0 %v386
    %426 = vmatmul.bf16.gmra.mxu0 %v284
    %v427 = vpop.f32.mrf.mxu0
    %v428 = vadd.f32 %v320, %v427
    %v429 = vpop.f32.mrf.mxu0
    %v430 = vadd.f32 %v320, %v429
    %431 = vdwg.mxu0
    %432 = vmatpush.bf16.msra.mxu0 %v401
    %433 = vmatpush.bf16.msra.mxu0 %v400
    %434 = vmatpush.bf16.msra.mxu0 %v399
    %435 = vmatpush.bf16.msra.mxu0 %v398
    %436 = vmatpush.bf16.msra.mxu0 %v397
    %437 = vmatpush.bf16.msra.mxu0 %v396
    %438 = vmatpush.bf16.msra.mxu0 %v395
    %439 = vmatpush.bf16.msra.mxu0 %v394
    %440 = vmatmul.bf16.gmra.mxu0 %v285
    %v441 = vpop.f32.mrf.mxu0
    %v442 = vadd.f32 %v428, %v441
    %v443 = vpop.f32.mrf.mxu0
    %v444 = vadd.f32 %v430, %v443
    %445 = vdwg.mxu0
    %v446 = vadd.f32 %v88, %v442
    %v447 = vadd.f32 %v89, %v444
    %448 = vst [vmem:[#allocation10] sm:$0xff] %v446
    %449 = vst [vmem:[#allocation10 + $0x8] sm:$0xff] %v447
    // Predicated region
    $region46: #{tpu_custom_call.1} parent=1 // pred_check
      _
    $region47: #{tpu_custom_call.1} parent=1 // pred_check_branch
      %451 = sbr.rel (0) target = $region49
    $region48: #{tpu_custom_call.1} parent=1 // pred_region
      %453 = vsyncadd [#allocation4], 0
      %s454 = sshll.u32 [#allocation10], 4
      %s455 = int_to_ptr.vmem [resolvable:$true] %s454
      %s456 = sshll.u32 %s7, 4
      %s457 = int_to_ptr.hbm [resolvable:$true] %s456
      %462 = dma.vmem_to_hbm [thread:$0]  %s455, 256, %s457, [#allocation4], 128, 128, 8
    $region49: #{tpu_custom_call.1} parent=1 // pred_fallthru
      _
    // Predicated region
    $region50: #{tpu_custom_call.1} parent=1 // pred_check
      _
    $region51: #{tpu_custom_call.1} parent=1 // pred_check_branch
      %464 = sbr.rel (0) target = $region53
    $region52: #{tpu_custom_call.1} parent=1 // pred_region
      %466 = dma.done [#allocation4], 256
    $region53: #{tpu_custom_call.1} parent=1 // pred_fallthru
      _
    %467 = vsyncpa [#allocation3], 1
    %468 = vsyncpa [#allocation6], 1
    %469 = vsyncpa [#allocation9], 1
    %470 = vsyncpa [#allocation4], 1

// kernel: tpu_custom_call.1
$region0: #{tpu_custom_call.1}
  #allocation0 [shape = 'u32[]', space=smem, size = 0x4, offset = 0x4, fixed_abs, tag = 'smem constant byte address 0x4 - core index']
  #allocation1 [shape = 'u32[72,128]{1,0:T(1,128)}', space=vmem, size = 0x9000, scoped, tag = 'internal scratch']
  %s0 = inlined_call_operand.hbm [shape: f32[16,128], index: 0, kind: input, shape index: {}]
  %s1 = inlined_call_operand.hbm [shape: f32[1,128], index: 1, kind: input, shape index: {}]
  %s2 = inlined_call_operand.vmem [shape: f32[1,128], index: 2, kind: input, shape index: {}]
  %s3 = inlined_call_operand.hbm [shape: bf16[128,256], index: 3, kind: input, shape index: {}]
  %s4 = inlined_call_operand.vmem [shape: f32[1,256], index: 4, kind: input, shape index: {}]
  %s5 = inlined_call_operand.hbm [shape: bf16[256,128], index: 5, kind: input, shape index: {}]
  %s6 = inlined_call_operand.vmem [shape: f32[1,128], index: 6, kind: input, shape index: {}]
  %s7 = inlined_call_operand.hbm [shape: f32[16,128], index: 7, kind: output, shape index: {}]
  %s8 = sld [smem:[#allocation0]]
  $region54: #{tpu_custom_call.1} parent=0
    _
  %s10 = ssub.s32 1, %s8
  %s11 = scalar_select 0, %s10, %s8
  $region1: #{tpu_custom_call.1} parent=0
    #allocation2 [shape = 'u8[8192]{0}', space=vmem, size = 0x2000, scoped, tag = 'input window, operand 0, single buffered']
    #allocation3 [shape = 's32[1]{0}', space=sflag, size = 0x4, scoped, tag = 'scoped memory for tpu_custom_call.1']
    #allocation4 [shape = 's32[1]{0}', space=sflag, size = 0x4, scoped, tag = 'scoped memory for tpu_custom_call.1']
    #allocation5 [shape = 'u8[512]{0}', space=vmem, size = 0x400, scoped, tag = 'input window, operand 1, single buffered']
    #allocation6 [shape = 's32[1]{0}', space=sflag, size = 0x4, scoped, tag = 'scoped memory for tpu_custom_call.1']
    #allocation7 [shape = 'u8[65536]{0}', space=vmem, size = 0x10000, scoped, tag = 'input window, operand 3, single buffered']
    #allocation8 [shape = 'u8[65536]{0}', space=vmem, size = 0x10000, scoped, tag = 'input window, operand 5, single buffered']
    #allocation9 [shape = 's32[1]{0}', space=sflag, size = 0x4, scoped, tag = 'scoped memory for tpu_custom_call.1']
    #allocation10 [shape = 'u8[8192]{0}', space=vmem, size = 0x2000, scoped, tag = 'output window, operand 0, single buffered']
    %12 = vsyncpa [#allocation3], 0
    %13 = vsyncpa [#allocation6], 0
    %14 = vsyncpa [#allocation9], 0
    %15 = vsyncpa [#allocation4], 0
    // Predicated region
    $region2: #{tpu_custom_call.1} parent=1 // pred_check
      _
    $region3: #{tpu_custom_call.1} parent=1 // pred_check_branch
      %17 = sbr.rel (0) target = $region5
    $region4: #{tpu_custom_call.1} parent=1 // pred_region
      %19 = vsyncadd [#allocation3], 0
      %s20 = sshll.u32 %s0, 4
      %s21 = int_to_ptr.hbm [resolvable:$true] %s20
      %s22 = sshll.u32 [#allocation2], 4
      %s23 = int_to_ptr.vmem [resolvable:$true] %s22
      %28 = dma.hbm_to_vmem [thread:$0]  %s21, 256, %s23, [#allocation3], 128, 128, 8
    $region5: #{tpu_custom_call.1} parent=1 // pred_fallthru
      _
    // Predicated region
    $region6: #{tpu_custom_call.1} parent=1 // pred_check
      _
    $region7: #{tpu_custom_call.1} parent=1 // pred_check_branch
      %30 = sbr.rel (0) target = $region9
    $region8: #{tpu_custom_call.1} parent=1 // pred_region
      %32 = vsyncadd [#allocation6], 0
      %s34 = sshll.u32 %s1, 4
      %s35 = int_to_ptr.hbm [resolvable:$true] %s34
      %s36 = sshll.u32 [#allocation5], 4
      %s37 = int_to_ptr.vmem [resolvable:$true] %s36
      %39 = dma.hbm_to_vmem [thread:$0]  %s35, 16, %s37, [#allocation6]
    $region9: #{tpu_custom_call.1} parent=1 // pred_fallthru
      _
    // Predicated region
    $region10: #{tpu_custom_call.1} parent=1 // pred_check
      _
    $region11: #{tpu_custom_call.1} parent=1 // pred_check_branch
      %41 = sbr.rel (0) target = $region13
    $region12: #{tpu_custom_call.1} parent=1 // pred_region
      _
    $region13: #{tpu_custom_call.1} parent=1 // pred_fallthru
      _
    // Predicated region
    $region14: #{tpu_custom_call.1} parent=1 // pred_check
      _
    $region15: #{tpu_custom_call.1} parent=1 // pred_check_branch
      %43 = sbr.rel (0) target = $region17
    $region16: #{tpu_custom_call.1} parent=1 // pred_region
      %45 = vsyncadd [#allocation6], 0
      %s46 = sshll.u32 %s3, 4
      %s47 = int_to_ptr.hbm [resolvable:$true] %s46
      %s48 = sshll.u32 [#allocation7], 4
      %s49 = int_to_ptr.vmem [resolvable:$true] %s48
      %54 = dma.hbm_to_vmem [thread:$0]  %s47, 2048, %s49, [#allocation6], 128, 128, 8
    $region17: #{tpu_custom_call.1} parent=1 // pred_fallthru
      _
    // Predicated region
    $region18: #{tpu_custom_call.1} parent=1 // pred_check
      _
    $region19: #{tpu_custom_call.1} parent=1 // pred_check_branch
      %56 = sbr.rel (0) target = $region21
    $region20: #{tpu_custom_call.1} parent=1 // pred_region
      _
    $region21: #{tpu_custom_call.1} parent=1 // pred_fallthru
      _
    // Predicated region
    $region22: #{tpu_custom_call.1} parent=1 // pred_check
      _
    $region23: #{tpu_custom_call.1} parent=1 // pred_check_branch
      %58 = sbr.rel (0) target = $region25
    $region24: #{tpu_custom_call.1} parent=1 // pred_region
      %60 = vsyncadd [#allocation9], 0
      %s61 = sshll.u32 %s5, 4
      %s62 = int_to_ptr.hbm [resolvable:$true] %s61
      %s63 = sshll.u32 [#allocation8], 4
      %s64 = int_to_ptr.vmem [resolvable:$true] %s63
      %69 = dma.hbm_to_vmem [thread:$0]  %s62, 2048, %s64, [#allocation9], 64, 64, 4
    $region25: #{tpu_custom_call.1} parent=1 // pred_fallthru
      _
    // Predicated region
    $region26: #{tpu_custom_call.1} parent=1 // pred_check
      _
    $region27: #{tpu_custom_call.1} parent=1 // pred_check_branch
      %71 = sbr.rel (0) target = $region29
    $region28: #{tpu_custom_call.1} parent=1 // pred_region
      _
    $region29: #{tpu_custom_call.1} parent=1 // pred_fallthru
      _
    // Predicated region
    $region30: #{tpu_custom_call.1} parent=1 // pred_check
      _
    $region31: #{tpu_custom_call.1} parent=1 // pred_check_branch
      %73 = sbr.rel (0) target = $region33
    $region32: #{tpu_custom_call.1} parent=1 // pred_region
      %75 = dma.done [#allocation3], 256
    $region33: #{tpu_custom_call.1} parent=1 // pred_fallthru
      _
    // Predicated region
    $region34: #{tpu_custom_call.1} parent=1 // pred_check
      _
    $region35: #{tpu_custom_call.1} parent=1 // pred_check_branch
      %77 = sbr.rel (0) target = $region37
    $region36: #{tpu_custom_call.1} parent=1 // pred_region
      %79 = dma.done [#allocation6], 16
    $region37: #{tpu_custom_call.1} parent=1 // pred_fallthru
      _
    // Predicated region
    $region38: #{tpu_custom_call.1} parent=1 // pred_check
      _
    $region39: #{tpu_custom_call.1} parent=1 // pred_check_branch
      %81 = sbr.rel (0) target = $region41
    $region40: #{tpu_custom_call.1} parent=1 // pred_region
      %83 = dma.done [#allocation6], 2048
    $region41: #{tpu_custom_call.1} parent=1 // pred_fallthru
      _
    // Predicated region
    $region42: #{tpu_custom_call.1} parent=1 // pred_check
      _
    $region43: #{tpu_custom_call.1} parent=1 // pred_check_branch
      %85 = sbr.rel (0) target = $region45
    $region44: #{tpu_custom_call.1} parent=1 // pred_region
      %87 = dma.done [#allocation9], 2048
    $region45: #{tpu_custom_call.1} parent=1 // pred_fallthru
      _
    %v88 = vld [vmem:[#allocation2] sm:$0xff]
    %v89 = vld [vmem:[#allocation2 + $0x8] sm:$0xff]
    %90 = vadd.xlane.f32.xlu0 %v88
    %v91 = vpop.xlane.xlu0 %90
    %92 = vadd.xlane.f32.xlu0 %v89
    %v93 = vpop.xlane.xlu0 %92
    %v94 = vrcp.pop 128.0
    %v95 = vmul.f32 128.0, %v94
    %v96 = vsub.f32 1.0, %v95
    %v97 = vmul.f32 %v94, %v96
    %v98 = vadd.f32 %v94, %v97
    %vm99 = vweird.f32 %v94
    %v100 = vsel %vm99, %v94, %v98
    %v101 = vmul.f32 %v91, %v100
    %v102 = vmul.f32 %v93, %v100
    %v103 = vsub.f32 %v88, %v101
    %v104 = vsub.f32 %v89, %v102
    %v105 = vmul.f32 %v103, %v103
    %v106 = vmul.f32 %v104, %v104
    %107 = vadd.xlane.f32.xlu0 %v105
    %v108 = vpop.xlane.xlu0 %107
    %109 = vadd.xlane.f32.xlu0 %v106
    %v110 = vpop.xlane.xlu0 %109
    %v111 = vmul.f32 %v108, %v100
    %v112 = vmul.f32 %v110, %v100
    %v113 = vadd.f32 %v111, 1e-05
    %v114 = vadd.f32 %v112, 1e-05
    %v115 = vrsqrt.pop %v113
    %v116 = vmul.f32 %v115, %v113
    %v117 = vmul.f32 %v116, %v115
    %v118 = vmul.f32 0.5, %v117
    %v119 = vsub.f32 1.5, %v118
    %v120 = vmul.f32 %v115, %v119
    %vm121 = vweird.f32 %v113
    %vm122 = vweird.f32 %v115
    %vm123 = vmor %vm121, %vm122
    %v124 = vsel %vm123, %v115, %v120
    %v125 = vrsqrt.pop %v114
    %v126 = vmul.f32 %v125, %v114
    %v127 = vmul.f32 %v126, %v125
    %v128 = vmul.f32 0.5, %v127
    %v129 = vsub.f32 1.5, %v128
    %v130 = vmul.f32 %v125, %v129
    %vm131 = vweird.f32 %v114
    %vm132 = vweird.f32 %v125
    %vm133 = vmor %vm131, %vm132
    %v134 = vsel %vm133, %v125, %v130
    %v135 = vmul.f32 %v103, %v124
    %v136 = vmul.f32 %v104, %v134
    %v137 = vld [vmem:[#allocation5] sm:$0x1]
    %v139 = vperm.slane %v137, 0
    %v141 = vmul.f32 %v135, %v139
    %v142 = vmul.f32 %v136, %v139
    %v143 = vld [vmem:[%s2] sm:$0x1]
    %v145 = vperm.slane %v143, 0
    %v147 = vadd.f32 %v141, %v145
    %v148 = vadd.f32 %v142, %v145
    %v149 = vpack.c.bf16 %v148, %v147
    %v150 = vld [vmem:[#allocation7] sm:$0xff]
    %v151 = vld [vmem:[#allocation7 + $0x8] sm:$0xff]
    %v152 = vld [vmem:[#allocation7 + $0x10] sm:$0xff]
    %v153 = vld [vmem:[#allocation7 + $0x18] sm:$0xff]
    %v154 = vld [vmem:[#allocation7 + $0x20] sm:$0xff]
    %v155 = vld [vmem:[#allocation7 + $0x28] sm:$0xff]
    %v156 = vld [vmem:[#allocation7 + $0x30] sm:$0xff]
    %v157 = vld [vmem:[#allocation7 + $0x38] sm:$0xff]
    %v158 = vld [vmem:[#allocation7 + $0x40] sm:$0xff]
    %v159 = vld [vmem:[#allocation7 + $0x48] sm:$0xff]
    %v160 = vld [vmem:[#allocation7 + $0x50] sm:$0xff]
    %v161 = vld [vmem:[#allocation7 + $0x58] sm:$0xff]
    %v162 = vld [vmem:[#allocation7 + $0x60] sm:$0xff]
    %v163 = vld [vmem:[#allocation7 + $0x68] sm:$0xff]
    %v164 = vld [vmem:[#allocation7 + $0x70] sm:$0xff]
    %v165 = vld [vmem:[#allocation7 + $0x78] sm:$0xff]
    %v166 = vld [vmem:[%s4] sm:$0x3]
    %v168 = vperm.slane %v166, 0
    %v169 = vperm.slane %v166, 1
    %v188 = vunpack.c.l.b16 %v150
    %v189 = vunpack.c.h.b16 %v150
    %v190 = vunpack.c.l.b16 %v151
    %v191 = vunpack.c.h.b16 %v151
    %v192 = vunpack.c.l.b16 %v152
    %v193 = vunpack.c.h.b16 %v152
    %v194 = vunpack.c.l.b16 %v153
    %v195 = vunpack.c.h.b16 %v153
    %v196 = vunpack.c.l.b16 %v154
    %v197 = vunpack.c.h.b16 %v154
    %v198 = vunpack.c.l.b16 %v155
    %v199 = vunpack.c.h.b16 %v155
    %v200 = vunpack.c.l.b16 %v156
    %v201 = vunpack.c.h.b16 %v156
    %v202 = vunpack.c.l.b16 %v157
    %v203 = vunpack.c.h.b16 %v157
    %v204 = vunpack.c.l.b16 %v158
    %v205 = vunpack.c.h.b16 %v158
    %v206 = vunpack.c.l.b16 %v159
    %v207 = vunpack.c.h.b16 %v159
    %v208 = vunpack.c.l.b16 %v160
    %v209 = vunpack.c.h.b16 %v160
    %v210 = vunpack.c.l.b16 %v161
    %v211 = vunpack.c.h.b16 %v161
    %v212 = vunpack.c.l.b16 %v162
    %v213 = vunpack.c.h.b16 %v162
    %v214 = vunpack.c.l.b16 %v163
    %v215 = vunpack.c.h.b16 %v163
    %v216 = vunpack.c.l.b16 %v164
    %v217 = vunpack.c.h.b16 %v164
    %v218 = vunpack.c.l.b16 %v165
    %v219 = vunpack.c.h.b16 %v165
    %v220 = vpack.c.b16 %v190, %v188
    %v221 = vpack.c.b16 %v191, %v189
    %v222 = vpack.c.b16 %v194, %v192
    %v223 = vpack.c.b16 %v195, %v193
    %v224 = vpack.c.b16 %v198, %v196
    %v225 = vpack.c.b16 %v199, %v197
    %v226 = vpack.c.b16 %v202, %v200
    %v227 = vpack.c.b16 %v203, %v201
    %v228 = vpack.c.b16 %v206, %v204
    %v229 = vpack.c.b16 %v207, %v205
    %v230 = vpack.c.b16 %v210, %v208
    %v231 = vpack.c.b16 %v211, %v209
    %v232 = vpack.c.b16 %v214, %v212
    %v233 = vpack.c.b16 %v215, %v213
    %v234 = vpack.c.b16 %v218, %v216
    %v235 = vpack.c.b16 %v219, %v217
    %252 = vmatpush.bf16.msra.mxu0 %v234
    %253 = vmatpush.bf16.msra.mxu0 %v232
    %254 = vmatpush.bf16.msra.mxu0 %v230
    %255 = vmatpush.bf16.msra.mxu0 %v228
    %256 = vmatpush.bf16.msra.mxu0 %v226
    %257 = vmatpush.bf16.msra.mxu0 %v224
    %258 = vmatpush.bf16.msra.mxu0 %v222
    %259 = vmatpush.bf16.msra.mxu0 %v220
    %260 = vmatmul.bf16.gmra.mxu0 %v149
    %v261 = vpop.f32.mrf.mxu0
    %v262 = vadd.f32 %v168, %v261
    %v263 = vpop.f32.mrf.mxu0
    %v264 = vadd.f32 %v168, %v263
    %265 = vdwg.mxu0
    %266 = vmatpush.bf16.msra.mxu0 %v235
    %267 = vmatpush.bf16.msra.mxu0 %v233
    %268 = vmatpush.bf16.msra.mxu0 %v231
    %269 = vmatpush.bf16.msra.mxu0 %v229
    %270 = vmatpush.bf16.msra.mxu0 %v227
    %271 = vmatpush.bf16.msra.mxu0 %v225
    %272 = vmatpush.bf16.msra.mxu0 %v223
    %273 = vmatpush.bf16.msra.mxu0 %v221
    %274 = vmatmul.bf16.gmra.mxu0 %v149
    %v275 = vpop.f32.mrf.mxu0
    %v276 = vadd.f32 %v169, %v275
    %v277 = vpop.f32.mrf.mxu0
    %v278 = vadd.f32 %v169, %v277
    %279 = vdwg.mxu0
    %v280 = vmax.f32 %v262, 0.0
    %v281 = vmax.f32 %v276, 0.0
    %v282 = vmax.f32 %v264, 0.0
    %v283 = vmax.f32 %v278, 0.0
    %v284 = vpack.c.bf16 %v282, %v280
    %v285 = vpack.c.bf16 %v283, %v281
    %v286 = vld [vmem:[#allocation8] sm:$0xf]
    %v287 = vld [vmem:[#allocation8 + $0x4] sm:$0xf]
    %v288 = vld [vmem:[#allocation8 + $0x8] sm:$0xf]
    %v289 = vld [vmem:[#allocation8 + $0xc] sm:$0xf]
    %v290 = vld [vmem:[#allocation8 + $0x10] sm:$0xf]
    %v291 = vld [vmem:[#allocation8 + $0x14] sm:$0xf]
    %v292 = vld [vmem:[#allocation8 + $0x18] sm:$0xf]
    %v293 = vld [vmem:[#allocation8 + $0x1c] sm:$0xf]
    %v294 = vld [vmem:[#allocation8 + $0x20] sm:$0xf]
    %v295 = vld [vmem:[#allocation8 + $0x24] sm:$0xf]
    %v296 = vld [vmem:[#allocation8 + $0x28] sm:$0xf]
    %v297 = vld [vmem:[#allocation8 + $0x2c] sm:$0xf]
    %v298 = vld [vmem:[#allocation8 + $0x30] sm:$0xf]
    %v299 = vld [vmem:[#allocation8 + $0x34] sm:$0xf]
    %v300 = vld [vmem:[#allocation8 + $0x38] sm:$0xf]
    %v301 = vld [vmem:[#allocation8 + $0x3c] sm:$0xf]
    %v302 = vld [vmem:[#allocation8 + $0x40] sm:$0xf]
    %v303 = vld [vmem:[#allocation8 + $0x44] sm:$0xf]
    %v304 = vld [vmem:[#allocation8 + $0x48] sm:$0xf]
    %v305 = vld [vmem:[#allocation8 + $0x4c] sm:$0xf]
    %v306 = vld [vmem:[#allocation8 + $0x50] sm:$0xf]
    %v307 = vld [vmem:[#allocation8 + $0x54] sm:$0xf]
    %v308 = vld [vmem:[#allocation8 + $0x58] sm:$0xf]
    %v309 = vld [vmem:[#allocation8 + $0x5c] sm:$0xf]
    %v310 = vld [vmem:[#allocation8 + $0x60] sm:$0xf]
    %v311 = vld [vmem:[#allocation8 + $0x64] sm:$0xf]
    %v312 = vld [vmem:[#allocation8 + $0x68] sm:$0xf]
    %v313 = vld [vmem:[#allocation8 + $0x6c] sm:$0xf]
    %v314 = vld [vmem:[#allocation8 + $0x70] sm:$0xf]
    %v315 = vld [vmem:[#allocation8 + $0x74] sm:$0xf]
    %v316 = vld [vmem:[#allocation8 + $0x78] sm:$0xf]
    %v317 = vld [vmem:[#allocation8 + $0x7c] sm:$0xf]
    %v318 = vld [vmem:[%s6] sm:$0x1]
    %v320 = vperm.slane %v318, 0
    %v354 = vunpack.c.l.b16 %v286
    %v355 = vunpack.c.l.b16 %v287
    %v356 = vunpack.c.l.b16 %v288
    %v357 = vunpack.c.l.b16 %v289
    %v358 = vunpack.c.l.b16 %v290
    %v359 = vunpack.c.l.b16 %v291
    %v360 = vunpack.c.l.b16 %v292
    %v361 = vunpack.c.l.b16 %v293
    %v362 = vunpack.c.l.b16 %v294
    %v363 = vunpack.c.l.b16 %v295
    %v364 = vunpack.c.l.b16 %v296
    %v365 = vunpack.c.l.b16 %v297
    %v366 = vunpack.c.l.b16 %v298
    %v367 = vunpack.c.l.b16 %v299
    %v368 = vunpack.c.l.b16 %v300
    %v369 = vunpack.c.l.b16 %v301
    %v370 = vunpack.c.l.b16 %v302
    %v371 = vunpack.c.l.b16 %v303
    %v372 = vunpack.c.l.b16 %v304
    %v373 = vunpack.c.l.b16 %v305
    %v374 = vunpack.c.l.b16 %v306
    %v375 = vunpack.c.l.b16 %v307
    %v376 = vunpack.c.l.b16 %v308
    %v377 = vunpack.c.l.b16 %v309
    %v378 = vunpack.c.l.b16 %v310
    %v379 = vunpack.c.l.b16 %v311
    %v380 = vunpack.c.l.b16 %v312
    %v381 = vunpack.c.l.b16 %v313
    %v382 = vunpack.c.l.b16 %v314
    %v383 = vunpack.c.l.b16 %v315
    %v384 = vunpack.c.l.b16 %v316
    %v385 = vunpack.c.l.b16 %v317
    %v386 = vpack.c.b16 %v355, %v354
    %v387 = vpack.c.b16 %v357, %v356
    %v388 = vpack.c.b16 %v359, %v358
    %v389 = vpack.c.b16 %v361, %v360
    %v390 = vpack.c.b16 %v363, %v362
    %v391 = vpack.c.b16 %v365, %v364
    %v392 = vpack.c.b16 %v367, %v366
    %v393 = vpack.c.b16 %v369, %v368
    %v394 = vpack.c.b16 %v371, %v370
    %v395 = vpack.c.b16 %v373, %v372
    %v396 = vpack.c.b16 %v375, %v374
    %v397 = vpack.c.b16 %v377, %v376
    %v398 = vpack.c.b16 %v379, %v378
    %v399 = vpack.c.b16 %v381, %v380
    %v400 = vpack.c.b16 %v383, %v382
    %v401 = vpack.c.b16 %v385, %v384
    %418 = vmatpush.bf16.msra.mxu0 %v393
    %419 = vmatpush.bf16.msra.mxu0 %v392
    %420 = vmatpush.bf16.msra.mxu0 %v391
    %421 = vmatpush.bf16.msra.mxu0 %v390
    %422 = vmatpush.bf16.msra.mxu0 %v389
    %423 = vmatpush.bf16.msra.mxu0 %v388
    %424 = vmatpush.bf16.msra.mxu0 %v387
    %425 = vmatpush.bf16.msra.mxu0 %v386
    %426 = vmatmul.bf16.gmra.mxu0 %v284
    %v427 = vpop.f32.mrf.mxu0
    %v428 = vadd.f32 %v320, %v427
    %v429 = vpop.f32.mrf.mxu0
    %v430 = vadd.f32 %v320, %v429
    %431 = vdwg.mxu0
    %432 = vmatpush.bf16.msra.mxu0 %v401
    %433 = vmatpush.bf16.msra.mxu0 %v400
    %434 = vmatpush.bf16.msra.mxu0 %v399
    %435 = vmatpush.bf16.msra.mxu0 %v398
    %436 = vmatpush.bf16.msra.mxu0 %v397
    %437 = vmatpush.bf16.msra.mxu0 %v396
    %438 = vmatpush.bf16.msra.mxu0 %v395
    %439 = vmatpush.bf16.msra.mxu0 %v394
    %440 = vmatmul.bf16.gmra.mxu0 %v285
    %v441 = vpop.f32.mrf.mxu0
    %v442 = vadd.f32 %v428, %v441
    %v443 = vpop.f32.mrf.mxu0
    %v444 = vadd.f32 %v430, %v443
    %445 = vdwg.mxu0
    %v446 = vadd.f32 %v88, %v442
    %v447 = vadd.f32 %v89, %v444
    %448 = vst [vmem:[#allocation10] sm:$0xff] %v446
    %449 = vst [vmem:[#allocation10 + $0x8] sm:$0xff] %v447
    // Predicated region
    $region46: #{tpu_custom_call.1} parent=1 // pred_check
      _
    $region47: #{tpu_custom_call.1} parent=1 // pred_check_branch
      %451 = sbr.rel (0) target = $region49
    $region48: #{tpu_custom_call.1} parent=1 // pred_region
      %453 = vsyncadd [#allocation4], 0
      %s454 = sshll.u32 [#allocation10], 4
      %s455 = int_to_ptr.vmem [resolvable:$true] %s454
      %s456 = sshll.u32 %s7, 4
      %s457 = int_to_ptr.hbm [resolvable:$true] %s456
      %462 = dma.vmem_to_hbm [thread:$0]  %s455, 256, %s457, [#allocation4], 128, 128, 8
    $region49: #{tpu_custom_call.1} parent=1 // pred_fallthru
      _
    // Predicated region
    $region50: #{tpu_custom_call.1} parent=1 // pred_check
      _
    $region51: #{tpu_custom_call.1} parent=1 // pred_check_branch
      %464 = sbr.rel (0) target = $region53
    $region52: #{tpu_custom_call.1} parent=1 // pred_region
      %466 = dma.done [#allocation4], 256
    $region53: #{tpu_custom_call.1} parent=1 // pred_fallthru
      _
    %467 = vsyncpa [#allocation3], 1
    %468 = vsyncpa [#allocation6], 1
    %469 = vsyncpa [#allocation9], 1
    %470 = vsyncpa [#allocation4], 1

</llo_original>
